<compile_context>
chip_gen: v6e
topology: v6e:2x2x1
jax: 0.10.0
libtpu: 0.0.40
codegen_flags: <defaults>
</compile_context>

<pallas_src>
import functools

import jax
import jax.numpy as jnp
from jax.experimental import pallas as pl
from jax.experimental.pallas import tpu as pltpu


def _edge_pool_kernel(eb_ref, ea_ref, sum_ref, sum_sc, *, g_chunk):
    """Accumulate one (tile_e, D) edge tile into the (G_pad, D) accumulator.

    eb_ref : (1, tile_e) int32   lane-major graph id per edge
    ea_ref : (tile_e, D)         edge features (f32 or bf16)
    sum_ref: (G_pad, D) f32      per-core-split output block (resident)
    sum_sc : (G_pad, D) f32 VMEM accumulator across the edge-tile axis
    """
    i = pl.program_id(1)  # edge-tile (reduction) axis

    @pl.when(i == 0)
    def _():
        sum_sc[...] = jnp.zeros_like(sum_sc)

    eb = eb_ref[...]                      # (1, tile_e) int32
    ea = ea_ref[...]                      # (tile_e, D)
    g_pad = sum_sc.shape[0]

    # Statically-unrolled loop over G chunks keeps the one-hot a bounded
    # number of vregs wide even for large graph counts.
    for g0 in range(0, g_pad, g_chunk):
        gc = min(g_chunk, g_pad - g0)
        # (gc, 1) sublane iota; the compare broadcasts it against the
        # (1, tile_e) lane-major edge ids -> (gc, tile_e) one-hot, already in
        # the (G, K) @ (K, D) orientation the MXU wants (no transposes).
        gids = g0 + jax.lax.broadcasted_iota(jnp.int32, (gc, 1), 0)
        onehot = (eb == gids).astype(ea.dtype)
        sum_sc[pl.ds(g0, gc), :] += jax.lax.dot_general(
            onehot, ea, (((1,), (0,)), ((), ())),
            preferred_element_type=jnp.float32)

    @pl.when(i == pl.num_programs(1) - 1)
    def _():
        sum_ref[...] = sum_sc[...]


def _round_up(x, m):
    return ((x + m - 1) // m) * m


def _default_core_splits():
    # 2 TensorCores per chip on megacore parts (v7x / v4 / v5p); 1 on v5e/v6e.
    try:
        kind = jax.devices()[0].device_kind.lower()
    except Exception:
        return 1
    if ("v7" in kind) or ("7x" in kind) or ("v4" in kind) or ("v5p" in kind):
        return 2
    return 1


def basic_edge_pool(edge_index, edge_attr, batch, num_graphs, *,
                    reduce="mean", tile_bytes=1 << 20, num_core_splits=None,
                    stream_dtype="auto"):
    """edge_index: [2, E] int; edge_attr: [E, D] float; batch: [N] int.

    Returns [num_graphs, D]: scatter(edge_attr, batch[edge_index[0]], reduce).
    Only reduce in {'mean', 'sum'} is supported.
    stream_dtype='auto' streams f32 inputs as bf16 (halves HBM traffic;
    accumulation stays f32); pass None to stream at the input precision.
    """
    if reduce not in ("mean", "sum"):
        # TODO(synk): 'max'/'min' reductions need a non-MXU combine; not implemented.
        raise NotImplementedError(f"reduce={reduce!r} not supported")

    E, D = edge_attr.shape
    G = int(num_graphs)
    out_dtype = edge_attr.dtype

    if stream_dtype == "auto":
        stream_dtype = jnp.bfloat16 if edge_attr.dtype == jnp.float32 else None
    if stream_dtype is not None:
        edge_attr = edge_attr.astype(stream_dtype)
    ea_itemsize = jnp.dtype(edge_attr.dtype).itemsize

    # Glue: edge_batch = batch[edge_index[0]] (gather stays in JAX).
    edge_batch = jnp.take(batch, edge_index[0], axis=0).astype(jnp.int32)

    # Per-graph edge counts in plain JAX (O(E); avoids a degenerate N=1 matmul
    # and a lane-width-1 output in the kernel).
    seg_cnt = None
    if reduce == "mean":
        seg_cnt = jax.ops.segment_sum(
            jnp.ones((E,), jnp.float32), edge_batch, num_segments=G)

    # ---- tiling / padding -------------------------------------------------
    splits = (_default_core_splits() if num_core_splits is None
              else max(1, int(num_core_splits)))
    per_split = pl.cdiv(E, splits)
    # edge_attr tile sized by bytes (~1 MiB), 128-aligned (also satisfies bf16
    # sublane packing), clamped to the per-core-split edge range.
    tile_e = int(tile_bytes) // max(1, D * ea_itemsize)
    tile_e = max(128, min(tile_e, 8192))
    tile_e = min(tile_e, _round_up(per_split, 128))
    tile_e = max(128, (tile_e // 128) * 128)
    n_tiles = pl.cdiv(per_split, tile_e)
    E_pad = splits * n_tiles * tile_e

    if E_pad != E:
        pad = E_pad - E
        edge_attr = jnp.pad(edge_attr, ((0, pad), (0, 0)))
        # Padded edges get graph id == G: they never hit a real output row
        # (and counts above never see them), so they cannot bias the mean.
        edge_batch = jnp.pad(edge_batch, (0, pad), constant_values=G)
    # Lane-major: one contiguous 4*tile_e-byte burst per tile.
    edge_batch = edge_batch.reshape(1, E_pad)

    # Pad G rows to a sublane multiple for the accumulator / output.
    # TODO(synk): for huge G the (G_pad, D) accumulator itself should be
    # blocked over a grid axis (re-streaming edge_attr per G block).
    G_pad = _round_up(max(G, 1), 8)
    # Keep each one-hot chunk's working set ~<= 2 MiB.
    g_chunk = max(8, ((1 << 21) // max(1, tile_e * 4) // 8) * 8)
    g_chunk = min(g_chunk, G_pad)

    vmem_budget = (2 * tile_e * D * ea_itemsize    # edge_attr double-buffer
                   + 2 * tile_e * 4                # edge_batch double-buffer
                   + 4 * G_pad * D * 4             # accumulator + output block
                   + 2 * g_chunk * tile_e * 8      # one-hot / compare staging
                   + (2 << 20))                    # headroom
    vmem_limit = int(min(max(vmem_budget, 16 << 20), 56 << 20))

    cost = pl.CostEstimate(
        flops=2 * E_pad * G_pad * D,
        transcendentals=0,
        bytes_accessed=(E_pad * D * ea_itemsize + E_pad * 4
                        + splits * G_pad * D * 4),
    )

    kernel = functools.partial(_edge_pool_kernel, g_chunk=g_chunk)

    # TODO(synk): on v7x consider pipeline_mode=pl.Buffered(3) on the edge_attr
    # spec (3.2 TB/s HBM is harder to hide behind the tiny per-tile compute).
    sums = pl.pallas_call(
        kernel,
        out_shape=jax.ShapeDtypeStruct((splits, G_pad, D), jnp.float32),
        grid_spec=pltpu.PrefetchScalarGridSpec(
            num_scalar_prefetch=0,
            grid=(splits, n_tiles),
            in_specs=[
                pl.BlockSpec((1, tile_e), lambda c, i: (0, c * n_tiles + i)),
                pl.BlockSpec((tile_e, D), lambda c, i: (c * n_tiles + i, 0)),
            ],
            out_specs=pl.BlockSpec((None, G_pad, D), lambda c, i: (c, 0, 0)),
            scratch_shapes=[pltpu.VMEM((G_pad, D), jnp.float32)],
        ),
        compiler_params=pltpu.CompilerParams(
            dimension_semantics=("parallel", "arbitrary"),
            vmem_limit_bytes=vmem_limit),
        cost_estimate=cost,
    )(edge_batch, edge_attr)

    # Tiny epilogue: combine per-core partials, drop padded G rows, divide.
    seg_sum = jnp.sum(sums, axis=0)[:G]
    if reduce == "sum":
        return seg_sum.astype(out_dtype)
    return (seg_sum / jnp.maximum(seg_cnt, 1.0)[:, None]).astype(out_dtype)


if __name__ == "__main__":
    key = jax.random.PRNGKey(0)
    k1, k2, k3 = jax.random.split(key, 3)

    N = 64      # nodes
    E = 256     # edges
    D = 32      # edge feature dim
    G = 4       # graphs

    # node -> graph assignment (sorted, like typical PyG batching)
    batch = jnp.sort(jax.random.randint(k1, (N,), 0, G)).astype(jnp.int32)
    # random edges among nodes
    edge_index = jax.random.randint(k2, (2, E), 0, N).astype(jnp.int32)
    edge_attr = jax.random.normal(k3, (E, D), dtype=jnp.float32)

    # reference: scatter(edge_attr, batch[edge_index[0]], dim=0, reduce='mean')
    edge_batch = batch[edge_index[0]]
    ref_sum = jax.ops.segment_sum(edge_attr, edge_batch, num_segments=G)
    ref_cnt = jax.ops.segment_sum(jnp.ones((E, 1), jnp.float32), edge_batch,
                                  num_segments=G)
    ref = ref_sum / jnp.maximum(ref_cnt, 1.0)

    # exact path (f32 streaming)
    out_f32 = jax.block_until_ready(
        basic_edge_pool(edge_index, edge_attr, batch, num_graphs=G,
                        stream_dtype=None))
    assert out_f32.shape == (G, D)
    assert jnp.allclose(out_f32, ref, atol=1e-5, rtol=1e-5)

    # default path (bf16 streaming, f32 accumulation)
    out_bf = jax.block_until_ready(
        basic_edge_pool(edge_index, edge_attr, batch, num_graphs=G))
    assert out_bf.shape == (G, D)
    assert jnp.allclose(out_bf, ref, atol=5e-2, rtol=5e-2)

    print("KERNEL_OK")
</pallas_src>

<mosaic_0001>
module attributes {stable_mosaic.version = 11 : i64} {
  func.func @_edge_pool_kernel(%arg0: i32, %arg1: i32, %arg2: memref<1x256xi32, #tpu.memory_space<vmem>>, %arg3: memref<256x32xf32, #tpu.memory_space<vmem>>, %arg4: memref<1x8x32xf32, #tpu.memory_space<vmem>>, %arg5: memref<8x32xf32, #tpu.memory_space<vmem>>) attributes {dimension_semantics = [#tpu.dimension_semantics<parallel>, #tpu.dimension_semantics<arbitrary>], iteration_bounds = array<i64: 1, 1>, scalar_prefetch = 0 : i64, scratch_operands = 1 : i64, tpu.core_type = #tpu.core_type<tc>, window_params = [{transform_indices = @transform_0, window_bounds = array<i64: 1, 256>}, {transform_indices = @transform_1, window_bounds = array<i64: 256, 32>}, {transform_indices = @transform_2, window_bounds = array<i64: 1, 8, 32>}]} {
    %c0_i32 = arith.constant 0 : i32
    %0 = arith.cmpi eq, %arg1, %c0_i32 : i32
    %1 = arith.extui %0 : i1 to i32
    %c0_i32_0 = arith.constant 0 : i32
    %2 = arith.cmpi ne, %1, %c0_i32_0 : i32
    scf.if %2 {
      %cst_11 = arith.constant 0.000000e+00 : f32
      %20 = vector.broadcast %cst_11 : f32 to vector<8x32xf32>
      %c0_12 = arith.constant 0 : index
      %c0_13 = arith.constant 0 : index
      %21 = vector.load %arg5[%c0_12, %c0_13] : memref<8x32xf32, #tpu.memory_space<vmem>>, vector<8x32xf32>
      tpu.vector_store %arg5[%c0_12, %c0_13], %20 {strides = array<i32>} : memref<8x32xf32, #tpu.memory_space<vmem>>, vector<8x32xf32>,
    } else {
    }
    %c0 = arith.constant 0 : index
    %c0_1 = arith.constant 0 : index
    %3 = vector.load %arg2[%c0, %c0_1] : memref<1x256xi32, #tpu.memory_space<vmem>>, vector<1x256xi32>
    %c0_2 = arith.constant 0 : index
    %c0_3 = arith.constant 0 : index
    %4 = vector.load %arg3[%c0_2, %c0_3] : memref<256x32xf32, #tpu.memory_space<vmem>>, vector<256x32xf32>
    %5 = tpu.iota {dimensions = array<i32: 0>} : vector<8x1xi32>
    %c0_i32_4 = arith.constant 0 : i32
    %6 = vector.broadcast %c0_i32_4 : i32 to vector<8x1xi32>
    %7 = arith.addi %6, %5 : vector<8x1xi32>
    %8 = vector.broadcast %3 : vector<1x256xi32> to vector<8x256xi32>
    %9 = vector.broadcast %7 : vector<8x1xi32> to vector<8x256xi32>
    %10 = arith.cmpi eq, %8, %9 : vector<8x256xi32>
    %11 = arith.extui %10 : vector<8x256xi1> to vector<8x256xi32>
    %12 = arith.sitofp %11 : vector<8x256xi32> to vector<8x256xf32>
    %c0_5 = arith.constant 0 : index
    %c0_6 = arith.constant 0 : index
    %13 = vector.load %arg5[%c0_5, %c0_6] : memref<8x32xf32, #tpu.memory_space<vmem>>, vector<8x32xf32>
    %cst = arith.constant dense<0.000000e+00> : vector<8x32xf32>
    %14 = tpu.matmul %12, %4, %cst {dimension_numbers = #tpu.dot_dimension_numbers<[1], [0], [0], [1], [0, 0, 1, 1], [], []>} : vector<8x256xf32>, vector<256x32xf32>, vector<8x32xf32> -> vector<8x32xf32>
    %15 = arith.addf %13, %14 : vector<8x32xf32>
    %c0_7 = arith.constant 0 : index
    %c0_8 = arith.constant 0 : index
    %16 = vector.load %arg5[%c0_7, %c0_8] : memref<8x32xf32, #tpu.memory_space<vmem>>, vector<8x32xf32>
    tpu.vector_store %arg5[%c0_7, %c0_8], %15 {strides = array<i32>} : memref<8x32xf32, #tpu.memory_space<vmem>>, vector<8x32xf32>,
    %c0_i32_9 = arith.constant 0 : i32
    %17 = arith.cmpi eq, %arg1, %c0_i32_9 : i32
    %18 = arith.extui %17 : i1 to i32
    %c0_i32_10 = arith.constant 0 : i32
    %19 = arith.cmpi ne, %18, %c0_i32_10 : i32
    scf.if %19 {
      %c0_11 = arith.constant 0 : index
      %c0_12 = arith.constant 0 : index
      %20 = vector.load %arg5[%c0_11, %c0_12] : memref<8x32xf32, #tpu.memory_space<vmem>>, vector<8x32xf32>
      %c0_13 = arith.constant 0 : index
      %c0_14 = arith.constant 0 : index
      %c0_15 = arith.constant 0 : index
      %21 = vector.load %arg4[%c0_13, %c0_14, %c0_15] : memref<1x8x32xf32, #tpu.memory_space<vmem>>, vector<1x8x32xf32>
      %22 = vector.shape_cast %21 : vector<1x8x32xf32> to vector<8x32xf32>
      %23 = vector.shape_cast %20 : vector<8x32xf32> to vector<1x8x32xf32>
      tpu.vector_store %arg4[%c0_13, %c0_14, %c0_15], %23 {strides = array<i32>} : memref<1x8x32xf32, #tpu.memory_space<vmem>>, vector<1x8x32xf32>,
    } else {
    }
    return
  }
  func.func @transform_0(%arg0: i32, %arg1: i32) -> (i32, i32) {
    %c1_i32 = arith.constant 1 : i32
    %0 = arith.muli %arg0, %c1_i32 : i32
    %1 = arith.addi %0, %arg1 : i32
    %c0_i32 = arith.constant 0 : i32
    %c0_i32_0 = arith.constant 0 : i32
    return %c0_i32, %1 : i32, i32
  }
  func.func @transform_1(%arg0: i32, %arg1: i32) -> (i32, i32) {
    %c1_i32 = arith.constant 1 : i32
    %0 = arith.muli %arg0, %c1_i32 : i32
    %1 = arith.addi %0, %arg1 : i32
    %c0_i32 = arith.constant 0 : i32
    %c0_i32_0 = arith.constant 0 : i32
    return %1, %c0_i32 : i32, i32
  }
  func.func @transform_2(%arg0: i32, %arg1: i32) -> (i32, i32, i32) {
    %c0_i32 = arith.constant 0 : i32
    %c0_i32_0 = arith.constant 0 : i32
    %c0_i32_1 = arith.constant 0 : i32
    return %arg0, %c0_i32, %c0_i32_0 : i32, i32, i32
  }
}

</mosaic_0001>

<llo_original>
// kernel: tpu_custom_call.1
$region0: #{tpu_custom_call.1}
  #allocation0 [shape = 'u32[]', space=smem, size = 0x4, offset = 0x4, fixed_abs, tag = 'smem constant byte address 0x4 - core index']
  #allocation1 [shape = 'u32[144,128]{1,0:T(1,128)}', space=vmem, size = 0x12000, scoped, tag = 'internal scratch']
  #allocation2 [shape = 'f32[8,32]{1,0:T(8,128)}', space=vmem, size = 0x1000, scoped, tag = 'scratch operand']
  %s0 = inlined_call_operand.vmem [shape: s32[1,256], index: 0, kind: input, shape index: {}]
  %s1 = inlined_call_operand.vmem [shape: f32[256,32], index: 1, kind: input, shape index: {}]
  %s2 = inlined_call_operand.hbm [shape: f32[1,8,32], index: 2, kind: output, shape index: {}]
  %s3 = sld [smem:[#allocation0]]
  $region26: #{tpu_custom_call.1} parent=0
    _
  %s5 = ssub.s32 1, %s3
  %s6 = scalar_select 0, %s5, %s3
  $region1: #{tpu_custom_call.1} parent=0
    #allocation3 [shape = 'u8[4096]{0}', space=vmem, size = 0x1000, scoped, tag = 'output window, operand 0, single buffered']
    #allocation4 [shape = 's32[1]{0}', space=sflag, size = 0x4, scoped, tag = 'scoped memory for tpu_custom_call.1']
    %7 = vsyncpa [#allocation4], 0
    // Predicated region
    $region2: #{tpu_custom_call.1} parent=1 // pred_check
      _
    $region3: #{tpu_custom_call.1} parent=1 // pred_check_branch
      %9 = sbr.rel (0) target = $region5
    $region4: #{tpu_custom_call.1} parent=1 // pred_region
      %s10 = sadd.s32 0, 0
      %s11 = smul.u32 2, %s10
      %p12 = scmp.lt.s32.totalorder %s11, 1
      %s13 = scalar_select %p12, %s11, 1
      %s14 = scalar_lea.vmem %s0, %s13
      %s15 = sadd.s32 0, 0
      %s16 = smul.u32 2, %s15
    $region5: #{tpu_custom_call.1} parent=1 // pred_fallthru
      _
    // Predicated region
    $region6: #{tpu_custom_call.1} parent=1 // pred_check
      _
    $region7: #{tpu_custom_call.1} parent=1 // pred_check_branch
      %18 = sbr.rel (0) target = $region9
    $region8: #{tpu_custom_call.1} parent=1 // pred_region
      %s19 = sadd.s32 0, 0
      %s20 = smul.u32 32, %s19
      %p21 = scmp.lt.s32.totalorder %s20, 31
      %s22 = scalar_select %p21, %s20, 31
      %s23 = smul.addr %s22, 8
      %s24 = scalar_lea.vmem %s1, %s23
      %s25 = sadd.s32 0, 0
      %s26 = smul.u32 32, %s25
    $region9: #{tpu_custom_call.1} parent=1 // pred_fallthru
      _
    %s27 = sadd.s32 0, 0
    %s28 = smul.u32 2, %s27
    %p29 = scmp.lt.s32.totalorder %s28, 1
    %s30 = scalar_select %p29, %s28, 1
    %s31 = scalar_lea.vmem %s0, %s30
    %s32 = sadd.s32 0, 0
    %s33 = smul.u32 32, %s32
    %p34 = scmp.lt.s32.totalorder %s33, 31
    %s35 = scalar_select %p34, %s33, 31
    %s36 = smul.addr %s35, 8
    %s37 = scalar_lea.vmem %s1, %s36
    %s38 = sadd.s32 0, 0
    %s39 = smul.u32 2, %s38
    %p40 = scmp.lt.s32.totalorder %s39, 1
    %s41 = scalar_select %p40, %s39, 1
    %s42 = scalar_lea.vmem %s0, %s41
    %s43 = sadd.s32 0, 0
    %s44 = smul.u32 2, %s43
    %s45 = sadd.s32 0, 0
    %s46 = smul.u32 32, %s45
    %p47 = scmp.lt.s32.totalorder %s46, 31
    %s48 = scalar_select %p47, %s46, 31
    %s49 = smul.addr %s48, 8
    %s50 = scalar_lea.vmem %s1, %s49
    %s51 = sadd.s32 0, 0
    %s52 = smul.u32 32, %s51
    %p53 = scmp.eq.s32.totalorder 0, 0
    // Predicated region
    $region10: #{tpu_custom_call.1} parent=1 // pred_check
      %p54 = pneg %p53
    $region11: #{tpu_custom_call.1} parent=1 // pred_check_branch
      %56 = sbr.rel (%p54) target = $region13
    $region12: #{tpu_custom_call.1} parent=1 // pred_region
      %vm57 = vcmask 261120
      %58 = vst.msk [vmem:[#allocation2] sm:$0xff] %vm57, 0.0
    $region13: #{tpu_custom_call.1} parent=1 // pred_fallthru
      _
    %v59 = vld [vmem:[%s42] sm:$0x3]
    %v60 = vld [vmem:[%s50] sm:$0xff]
    %v61 = vld [vmem:[%s50 + $0x8] sm:$0xff]
    %v62 = vld [vmem:[%s50 + $0x10] sm:$0xff]
    %v63 = vld [vmem:[%s50 + $0x18] sm:$0xff]
    %v64 = vld [vmem:[%s50 + $0x20] sm:$0xff]
    %v65 = vld [vmem:[%s50 + $0x28] sm:$0xff]
    %v66 = vld [vmem:[%s50 + $0x30] sm:$0xff]
    %v67 = vld [vmem:[%s50 + $0x38] sm:$0xff]
    %v68 = vld [vmem:[%s50 + $0x40] sm:$0xff]
    %v69 = vld [vmem:[%s50 + $0x48] sm:$0xff]
    %v70 = vld [vmem:[%s50 + $0x50] sm:$0xff]
    %v71 = vld [vmem:[%s50 + $0x58] sm:$0xff]
    %v72 = vld [vmem:[%s50 + $0x60] sm:$0xff]
    %v73 = vld [vmem:[%s50 + $0x68] sm:$0xff]
    %v74 = vld [vmem:[%s50 + $0x70] sm:$0xff]
    %v75 = vld [vmem:[%s50 + $0x78] sm:$0xff]
    %v76 = vld [vmem:[%s50 + $0x80] sm:$0xff]
    %v77 = vld [vmem:[%s50 + $0x88] sm:$0xff]
    %v78 = vld [vmem:[%s50 + $0x90] sm:$0xff]
    %v79 = vld [vmem:[%s50 + $0x98] sm:$0xff]
    %v80 = vld [vmem:[%s50 + $0xa0] sm:$0xff]
    %v81 = vld [vmem:[%s50 + $0xa8] sm:$0xff]
    %v82 = vld [vmem:[%s50 + $0xb0] sm:$0xff]
    %v83 = vld [vmem:[%s50 + $0xb8] sm:$0xff]
    %v84 = vld [vmem:[%s50 + $0xc0] sm:$0xff]
    %v85 = vld [vmem:[%s50 + $0xc8] sm:$0xff]
    %v86 = vld [vmem:[%s50 + $0xd0] sm:$0xff]
    %v87 = vld [vmem:[%s50 + $0xd8] sm:$0xff]
    %v88 = vld [vmem:[%s50 + $0xe0] sm:$0xff]
    %v89 = vld [vmem:[%s50 + $0xe8] sm:$0xff]
    %v90 = vld [vmem:[%s50 + $0xf0] sm:$0xff]
    %v91 = vld [vmem:[%s50 + $0xf8] sm:$0xff]
    %v92 = vlaneseq
    %v93 = vshrl.u32 %v92, 7
    %v94 = vlaneseq
    %v95 = vshrl.u32 %v94, 7
    %v96 = vsub.s32 0, %v95
    %v97 = vrot.slane %v59, %v96
    %v98 = vlaneseq
    %v99 = vshrl.u32 %v98, 7
    %v100 = vsub.s32 1, %v99
    %v101 = vrot.slane %v59, %v100
    %vm102 = vcmp.eq.s32.totalorder %v97, %v93
    %vm103 = vcmp.eq.s32.totalorder %v101, %v93
    %v104 = vsel %vm102, 1, 0
    %v105 = vsel %vm103, 1, 0
    %v106 = vcvt.s32.f32 %v104
    %v107 = vcvt.s32.f32 %v105
    %v108 = vld [vmem:[#allocation2] sm:$0xff]
    %109 = vmatprep.subr.mxu0 0.0
    %110 = vmatpush1.msra.mxu0 %v75
    %111 = vmatprep.subr.mxu0 0.0
    %112 = vmatpush1.msra.mxu0 %v74
    %113 = vmatprep.subr.mxu0 0.0
    %114 = vmatpush1.msra.mxu0 %v73
    %115 = vmatprep.subr.mxu0 0.0
    %116 = vmatpush1.msra.mxu0 %v72
    %117 = vmatprep.subr.mxu0 0.0
    %118 = vmatpush1.msra.mxu0 %v71
    %119 = vmatprep.subr.mxu0 0.0
    %120 = vmatpush1.msra.mxu0 %v70
    %121 = vmatprep.subr.mxu0 0.0
    %122 = vmatpush1.msra.mxu0 %v69
    %123 = vmatprep.subr.mxu0 0.0
    %124 = vmatpush1.msra.mxu0 %v68
    %125 = vmatprep.subr.mxu0 0.0
    %126 = vmatpush1.msra.mxu0 %v67
    %127 = vmatprep.subr.mxu0 0.0
    %128 = vmatpush1.msra.mxu0 %v66
    %129 = vmatprep.subr.mxu0 0.0
    %130 = vmatpush1.msra.mxu0 %v65
    %131 = vmatprep.subr.mxu0 0.0
    %132 = vmatpush1.msra.mxu0 %v64
    %133 = vmatprep.subr.mxu0 0.0
    %134 = vmatpush1.msra.mxu0 %v63
    %135 = vmatprep.subr.mxu0 0.0
    %136 = vmatpush1.msra.mxu0 %v62
    %137 = vmatprep.subr.mxu0 0.0
    %138 = vmatpush1.msra.mxu0 %v61
    %139 = vmatprep.subr.mxu0 0.0
    %140 = vmatpush1.msra.mxu0 %v60
    %141 = vmatprep.subr.mxu0 0.0
    %142 = vmatpush2.msra.mxu0 %v91
    %143 = vmatprep.subr.mxu0 0.0
    %144 = vmatpush2.msra.mxu0 %v90
    %145 = vmatprep.subr.mxu0 0.0
    %146 = vmatpush2.msra.mxu0 %v89
    %147 = vmatprep.subr.mxu0 0.0
    %148 = vmatpush2.msra.mxu0 %v88
    %149 = vmatprep.subr.mxu0 0.0
    %150 = vmatpush2.msra.mxu0 %v87
    %151 = vmatprep.subr.mxu0 0.0
    %152 = vmatpush2.msra.mxu0 %v86
    %153 = vmatprep.subr.mxu0 0.0
    %154 = vmatpush2.msra.mxu0 %v85
    %155 = vmatprep.subr.mxu0 0.0
    %156 = vmatpush2.msra.mxu0 %v84
    %157 = vmatprep.subr.mxu0 0.0
    %158 = vmatpush2.msra.mxu0 %v83
    %159 = vmatprep.subr.mxu0 0.0
    %160 = vmatpush2.msra.mxu0 %v82
    %161 = vmatprep.subr.mxu0 0.0
    %162 = vmatpush2.msra.mxu0 %v81
    %163 = vmatprep.subr.mxu0 0.0
    %164 = vmatpush2.msra.mxu0 %v80
    %165 = vmatprep.subr.mxu0 0.0
    %166 = vmatpush2.msra.mxu0 %v79
    %167 = vmatprep.subr.mxu0 0.0
    %168 = vmatpush2.msra.mxu0 %v78
    %169 = vmatprep.subr.mxu0 0.0
    %170 = vmatpush2.msra.mxu0 %v77
    %171 = vmatprep.subr.mxu0 0.0
    %172 = vmatpush2.msra.mxu0 %v76
    %173 = vmatprep.mubr.f32.mxu0 %v107
    %174 = vmatmul.mubr.f32.gmra.mxu0 %v106
    %v175 = vpop.f32.mrf.mxu0
    %v176 = vadd.f32 0.0, %v175
    %v177 = vpop.f32.mrf.mxu0
    %178 = vdwg.mxu0
    %v179 = vadd.f32 %v108, %v176
    %vm180 = vcmask 261120
    %181 = vst.msk [vmem:[#allocation2] sm:$0xff] %vm180, %v179
    // Predicated region
    $region14: #{tpu_custom_call.1} parent=1 // pred_check
      %p182 = pneg %p53
    $region15: #{tpu_custom_call.1} parent=1 // pred_check_branch
      %184 = sbr.rel (%p182) target = $region17
    $region16: #{tpu_custom_call.1} parent=1 // pred_region
      %v185 = vld [vmem:[#allocation2] sm:$0xff]
      %186 = vst.msk [vmem:[#allocation3] sm:$0xff] %vm180, %v185
    $region17: #{tpu_custom_call.1} parent=1 // pred_fallthru
      _
    // Predicated region
    $region18: #{tpu_custom_call.1} parent=1 // pred_check
      _
    $region19: #{tpu_custom_call.1} parent=1 // pred_check_branch
      %188 = sbr.rel (0) target = $region21
    $region20: #{tpu_custom_call.1} parent=1 // pred_region
      %s190 = ssub.s32 128, 128
      %191 = vsyncadd [#allocation4], %s190
      %s193 = sshll.u32 [#allocation3], 4
      %s194 = int_to_ptr.vmem [resolvable:$true] %s193
      %196 = dma.vmem_to_hbm [thread:$0]  %s194, 128, %s2, [#allocation4]
    $region21: #{tpu_custom_call.1} parent=1 // pred_fallthru
      _
    // Predicated region
    $region22: #{tpu_custom_call.1} parent=1 // pred_check
      _
    $region23: #{tpu_custom_call.1} parent=1 // pred_check_branch
      %198 = sbr.rel (0) target = $region25
    $region24: #{tpu_custom_call.1} parent=1 // pred_region
      %199 = dma.done [#allocation4], 128
    $region25: #{tpu_custom_call.1} parent=1 // pred_fallthru
      _
    %200 = vsyncpa [#allocation4], 1

</llo_original>
